<compile_context>
chip_gen: v5e
topology: v5e:2x2
jax: 0.10.0
libtpu: 0.0.40
codegen_flags: <defaults>
</compile_context>

<pallas_src>
import jax
import jax.numpy as jnp
from jax.experimental import pallas as pl
from jax.experimental.pallas import tpu as pltpu


_LANE = 128
_MAX_LANE_COLS = 8192                    # cap lane width (32 KiB/row for f32)
_TARGET_TILE_BYTES = 4 * 1024 * 1024     # ~4 MiB/block; 4 live buffers ~16 MiB
_SPLIT_BYTES = 2 * 1024 * 1024           # above this, force >=2 grid blocks (v7x 2 TCs)
_VMEM_LIMIT_BYTES = 32 * 1024 * 1024     # conservative vs v7x 64 MiB, explicit for v5e


def _identity_kernel(x_ref, o_ref):
    # Elementwise copy of the current VMEM tile (full-width vst: cols % 128 == 0).
    o_ref[...] = x_ref[...]


def _sublane(itemsize):
    """Packed sublane count for the dtype: f32 -> 8, bf16 -> 16, int8/fp8 -> 32."""
    return max(8, 32 // max(1, itemsize))


def _lane_dense_view(total, sublane):
    """Return (rows, cols) with cols a multiple of 128 dividing total.

    Prefers the largest cols for which rows is still a multiple of `sublane`
    (and >= sublane) so every vreg / store is sublane-full; falls back to the
    largest dividing cols otherwise.  Returns None if total % 128 != 0.
    """
    if total % _LANE != 0:
        return None
    best = None        # largest cols regardless of sublane quality
    best_full = None   # largest cols with sublane-full rows
    cols = _LANE
    while cols <= _MAX_LANE_COLS and total % cols == 0:
        rows = total // cols
        best = (rows, cols)
        if rows >= sublane and rows % sublane == 0:
            best_full = (rows, cols)
        cols *= 2
    return best_full if best_full is not None else best


def _choose_tile_rows(rows, cols, itemsize, sublane):
    """Largest row tile within the VMEM budget, sublane-aligned, split >=2 for big copies."""
    bytes_per_row = max(1, cols * itemsize)
    total_bytes = rows * bytes_per_row
    target = max(1, _TARGET_TILE_BYTES // bytes_per_row)
    tile = min(rows, target)
    # v7x has 2 TensorCores sharing HBM: make sure mid/large copies span >=2
    # grid blocks so both cores stream (harmless one extra step on v5e/v6e).
    if tile >= rows and total_bytes >= _SPLIT_BYTES and rows >= 2 * sublane:
        tile = (rows + 1) // 2
    if tile < rows:
        # Non-full blocks must keep the sublane dim a multiple of the packed
        # sublane count (dtype-aware) to avoid masked partial-sublane stores.
        tile = max(sublane, tile - (tile % sublane))
        tile = min(tile, rows)
    return tile


def _pallas_copy_2d(x2d):
    rows, cols = x2d.shape
    itemsize = jnp.dtype(x2d.dtype).itemsize
    sublane = _sublane(itemsize)
    tile_rows = _choose_tile_rows(rows, cols, itemsize, sublane)
    grid = (pl.cdiv(rows, tile_rows),)

    return pl.pallas_call(
        _identity_kernel,
        out_shape=jax.ShapeDtypeStruct((rows, cols), x2d.dtype),
        grid_spec=pltpu.PrefetchScalarGridSpec(
            num_scalar_prefetch=0,
            grid=grid,
            in_specs=[pl.BlockSpec((tile_rows, cols), lambda i: (i, 0))],
            out_specs=pl.BlockSpec((tile_rows, cols), lambda i: (i, 0)),
        ),
        compiler_params=pltpu.CompilerParams(
            dimension_semantics=("parallel",),
            vmem_limit_bytes=_VMEM_LIMIT_BYTES,
        ),
        cost_estimate=pl.CostEstimate(
            flops=0,
            transcendentals=0,
            bytes_accessed=2 * rows * cols * itemsize,
        ),
        input_output_aliases={0: 0},
    )(x2d)


def base_no_model_forward(x, use_pallas=True):
    """BaseNoModel.forward(x) = x.

    use_pallas=False returns x directly (zero HBM traffic — the optimal
    identity).  use_pallas=True routes through a lane-dense Pallas copy
    kernel so the Pallas path is exercised.
    """
    if not use_pallas:
        return x

    orig_shape = x.shape
    total = x.size
    if total == 0:
        return x  # nothing to copy

    itemsize = jnp.dtype(x.dtype).itemsize
    sublane = _sublane(itemsize)

    view = _lane_dense_view(total, sublane)
    if view is not None:
        rows, cols = view
        out2d = _pallas_copy_2d(x.reshape(rows, cols))
        return out2d.reshape(orig_shape)

    # Fallback (total not a multiple of 128): flatten and pad the tail to the
    # next multiple of sublane*128 so the hot path still issues full-width
    # unmasked stores, then trim.
    # TODO(synk): split into a lane-dense body + small remainder copy to avoid
    # the extra padding pass.
    chunk = sublane * _LANE
    padded_total = ((total + chunk - 1) // chunk) * chunk
    flat = jnp.pad(x.reshape(-1), (0, padded_total - total))
    rows, cols = _lane_dense_view(padded_total, sublane)
    out2d = _pallas_copy_2d(flat.reshape(rows, cols))
    return out2d.reshape(-1)[:total].reshape(orig_shape)


if __name__ == "__main__":
    key = jax.random.PRNGKey(0)
    # NCHW, small shapes: batch=2, channels=4, spatial=16x16
    x = jax.random.normal(key, (2, 4, 16, 16), dtype=jnp.float32)

    y = base_no_model_forward(x)
    jax.block_until_ready(y)

    assert y.shape == x.shape and y.dtype == x.dtype
    assert bool(jnp.all(y == x))
    print("KERNEL_OK")
</pallas_src>

<mosaic_0001>
module attributes {stable_mosaic.version = 11 : i64} {
  func.func @_identity_kernel(%arg0: i32, %arg1: memref<8x256xf32, #tpu.memory_space<vmem>>, %arg2: memref<8x256xf32, #tpu.memory_space<vmem>>) attributes {dimension_semantics = [#tpu.dimension_semantics<parallel>], iteration_bounds = array<i64: 1>, scalar_prefetch = 0 : i64, scratch_operands = 0 : i64, tpu.core_type = #tpu.core_type<tc>, window_params = [{transform_indices = @transform_0, window_bounds = array<i64: 8, 256>}, {transform_indices = @transform_1, window_bounds = array<i64: 8, 256>}]} {
    %c0 = arith.constant 0 : index
    %c0_0 = arith.constant 0 : index
    %0 = vector.load %arg1[%c0, %c0_0] : memref<8x256xf32, #tpu.memory_space<vmem>>, vector<8x256xf32>
    %c0_1 = arith.constant 0 : index
    %c0_2 = arith.constant 0 : index
    %1 = vector.load %arg2[%c0_1, %c0_2] : memref<8x256xf32, #tpu.memory_space<vmem>>, vector<8x256xf32>
    tpu.vector_store %arg2[%c0_1, %c0_2], %0 {strides = array<i32>} : memref<8x256xf32, #tpu.memory_space<vmem>>, vector<8x256xf32>,
    return
  }
  func.func @transform_0(%arg0: i32) -> (i32, i32) {
    %c0_i32 = arith.constant 0 : i32
    %c0_i32_0 = arith.constant 0 : i32
    return %arg0, %c0_i32 : i32, i32
  }
  func.func @transform_1(%arg0: i32) -> (i32, i32) {
    %c0_i32 = arith.constant 0 : i32
    %c0_i32_0 = arith.constant 0 : i32
    return %arg0, %c0_i32 : i32, i32
  }
}

</mosaic_0001>

<llo_original>
// kernel: tpu_custom_call.1
$region0: #{tpu_custom_call.1}
  #allocation0 [shape = 'u32[]', space=smem, size = 0x4, offset = 0x4, fixed_abs, tag = 'smem constant byte address 0x4 - core index']
  #allocation1 [shape = 'u32[72,128]{1,0:T(1,128)}', space=vmem, size = 0x9000, scoped, tag = 'internal scratch']
  %s0 = inlined_call_operand.hbm [shape: f32[8,256], index: 0, kind: input, shape index: {}, may-alias: {0,1}]
  %s1 = inlined_call_operand.hbm [shape: f32[8,256], index: 1, kind: output, shape index: {}, may-alias: {0,1}]
  %s2 = sld [smem:[#allocation0]]
  $region18: #{tpu_custom_call.1} parent=0
    _
  %s4 = ssub.s32 1, %s2
  %s5 = scalar_select 0, %s4, %s2
  $region1: #{tpu_custom_call.1} parent=0
    #allocation2 [shape = 'u8[8192]{0}', space=vmem, size = 0x2000, scoped, tag = 'input window, operand 0, single buffered']
    #allocation3 [shape = 's32[1]{0}', space=sflag, size = 0x4, scoped, tag = 'scoped memory for tpu_custom_call.1']
    #allocation4 [shape = 's32[1]{0}', space=sflag, size = 0x4, scoped, tag = 'scoped memory for tpu_custom_call.1']
    #allocation5 [shape = 'u8[8192]{0}', space=vmem, size = 0x2000, scoped, tag = 'output window, operand 0, single buffered']
    %6 = vsyncpa [#allocation3], 0
    %7 = vsyncpa [#allocation4], 0
    // Predicated region
    $region2: #{tpu_custom_call.1} parent=1 // pred_check
      _
    $region3: #{tpu_custom_call.1} parent=1 // pred_check_branch
      %9 = sbr.rel (0) target = $region5
    $region4: #{tpu_custom_call.1} parent=1 // pred_region
      %11 = vsyncadd [#allocation3], 0
      %s13 = sshll.u32 %s0, 4
      %s14 = int_to_ptr.hbm [resolvable:$true] %s13
      %s15 = sshll.u32 [#allocation2], 4
      %s16 = int_to_ptr.vmem [resolvable:$true] %s15
      %18 = dma.hbm_to_vmem [thread:$0]  %s14, 256, %s16, [#allocation3]
    $region5: #{tpu_custom_call.1} parent=1 // pred_fallthru
      _
    // Predicated region
    $region6: #{tpu_custom_call.1} parent=1 // pred_check
      _
    $region7: #{tpu_custom_call.1} parent=1 // pred_check_branch
      %20 = sbr.rel (0) target = $region9
    $region8: #{tpu_custom_call.1} parent=1 // pred_region
      %22 = dma.done [#allocation3], 256
    $region9: #{tpu_custom_call.1} parent=1 // pred_fallthru
      _
    %v23 = vld [vmem:[#allocation2] sm:$0xff]
    %v24 = vld [vmem:[#allocation2 + $0x8] sm:$0xff]
    %25 = vst [vmem:[#allocation5] sm:$0xff] %v23
    %26 = vst [vmem:[#allocation5 + $0x8] sm:$0xff] %v24
    // Predicated region
    $region10: #{tpu_custom_call.1} parent=1 // pred_check
      _
    $region11: #{tpu_custom_call.1} parent=1 // pred_check_branch
      %28 = sbr.rel (0) target = $region13
    $region12: #{tpu_custom_call.1} parent=1 // pred_region
      %30 = vsyncadd [#allocation4], 0
      %s32 = sshll.u32 [#allocation5], 4
      %s33 = int_to_ptr.vmem [resolvable:$true] %s32
      %s34 = sshll.u32 %s1, 4
      %s35 = int_to_ptr.hbm [resolvable:$true] %s34
      %37 = dma.vmem_to_hbm [thread:$0]  %s33, 256, %s35, [#allocation4]
    $region13: #{tpu_custom_call.1} parent=1 // pred_fallthru
      _
    // Predicated region
    $region14: #{tpu_custom_call.1} parent=1 // pred_check
      _
    $region15: #{tpu_custom_call.1} parent=1 // pred_check_branch
      %39 = sbr.rel (0) target = $region17
    $region16: #{tpu_custom_call.1} parent=1 // pred_region
      %41 = dma.done [#allocation4], 256
    $region17: #{tpu_custom_call.1} parent=1 // pred_fallthru
      _
    %42 = vsyncpa [#allocation3], 1
    %43 = vsyncpa [#allocation4], 1

</llo_original>
